<compile_context>
chip_gen: v7x
topology: tpu7x:2x2x1
jax: 0.10.0
libtpu: 0.0.40
codegen_flags: <defaults>
</compile_context>

<pallas_src>
import functools

import jax
import jax.numpy as jnp
from jax import lax
from jax.experimental import pallas as pl
from jax.experimental.pallas import tpu as pltpu


def _vmem_plan():
    """Returns (chunk-sizing budget bytes, vmem_limit_bytes), per generation.

    v7x only has 64 MiB physical VMEM per TC, so cap the tile budget lower
    there; v5e/v6e have 128 MiB physical (default scoped limit is 16/32 MiB,
    hence the explicit vmem_limit_bytes).
    """
    try:
        kind = jax.devices()[0].device_kind.lower()
    except Exception:  # pragma: no cover - defensive, fall back conservative
        kind = ""
    if "v7" in kind:
        return 24 << 20, 40 << 20
    return 40 << 20, 64 << 20


def _select_chunk(hw, c, in_bytes, budget_bytes):
    """Pick the pixel-chunk (lane) size from a VMEM budget.

    Accounting per lane of chunk: 2x double-buffered input blocks
    (C*in_bytes logits + 4B int32 target) plus ~6 live (C, chunk) f32
    temporaries in the kernel body (upcast, exp, probs, one-hot, products).
    """
    per_lane = 2 * (c * in_bytes + 4) + 6 * c * 4
    cap = max(128, min(budget_bytes // per_lane, 128 * 1024))
    cap = (cap // 128) * 128
    if hw <= cap:
        return hw                      # single full-extent block
    # Prefer a chunk (multiple of 128) that divides hw -> no tail masking.
    cand = cap
    while cand >= 128:
        if hw % cand == 0:
            return cand
        cand -= 128
    return cap                         # fall back: tail masking handles it


def _dice_sums_kernel(logits_ref, target_ref, inter_ref, union_ref, count_ref,
                      *, num_classes, ignore_index, hw, chunk, cps, needs_mask):
    """Accumulate per-class intersection/union sums and valid-pixel count.

    logits_ref: (1, C, chunk)   target_ref: (1, 1, chunk) int32
    inter_ref / union_ref: (1, 1, C, 1) f32   count_ref: (1, 1, 1, 1) f32
    """
    h = pl.program_id(2)

    @pl.when(h == 0)
    def _init():
        inter_ref[...] = jnp.zeros_like(inter_ref)
        union_ref[...] = jnp.zeros_like(union_ref)
        count_ref[...] = jnp.zeros_like(count_ref)

    logits = logits_ref[0].astype(jnp.float32)   # (C, chunk)
    target = target_ref[0]                       # (1, chunk) int32

    valid = target != ignore_index               # (1, chunk) bool
    if needs_mask:
        # Global pixel index of this lane (accounts for the split axis); mask
        # padded / out-of-range lanes of the last (partial / duplicated) chunk.
        h_glob = pl.program_id(0) * cps + h
        lane = lax.broadcasted_iota(jnp.int32, (1, chunk), 1)
        in_range = (h_glob * chunk + lane) < hw  # (1, chunk) bool
        valid = jnp.logical_and(valid, in_range)

    if num_classes == 1:
        # torch.sigmoid path
        probs = jax.nn.sigmoid(logits)                           # (1, chunk)
        if needs_mask:
            # Padded lanes hold garbage logits (possibly NaN): mask before use.
            probs = jnp.where(in_range, probs, 0.0)
        tgt = jnp.where(valid, target.astype(jnp.float32), 0.0)  # (1, chunk)
        inter = jnp.sum(probs * tgt, axis=1, keepdims=True)      # (1, 1)
        union = (jnp.sum(probs, axis=1, keepdims=True)
                 + jnp.sum(tgt, axis=1, keepdims=True))          # (1, 1)
    else:
        # softmax over the class (sublane) axis
        m = jnp.max(logits, axis=0, keepdims=True)               # (1, chunk)
        e = jnp.exp(logits - m)                                  # (C, chunk)
        inv = pl.reciprocal(jnp.sum(e, axis=0, keepdims=True),
                            approx=True)                         # EUP slot
        probs = e * inv                                          # (C, chunk)
        if needs_mask:
            # Garbage padded logits can make probs NaN; must mask before the
            # probs*ohf product and the union sum.
            probs = jnp.where(in_range, probs, 0.0)
        cls = lax.broadcasted_iota(jnp.int32, (num_classes, chunk), 0)
        ohf = jnp.logical_and(cls == target, valid).astype(jnp.float32)
        inter = jnp.sum(probs * ohf, axis=1, keepdims=True)      # (C, 1)
        union = (jnp.sum(probs, axis=1, keepdims=True)
                 + jnp.sum(ohf, axis=1, keepdims=True))          # (C, 1)

    inter_ref[...] += inter.reshape(1, 1, num_classes, 1)
    union_ref[...] += union.reshape(1, 1, num_classes, 1)
    count_ref[...] += jnp.sum(valid.astype(jnp.float32), axis=1,
                              keepdims=True).reshape(1, 1, 1, 1)


def dice_loss_pallas(logits, target, ignore_index, *, _force_chunk=None):
    """logits: (B, C, H, W); target: (B, H, W) int. Returns scalar loss."""
    B, C, H, W = logits.shape
    HW = H * W

    budget, vmem_limit = _vmem_plan()
    in_bytes = jnp.dtype(logits.dtype).itemsize
    if _force_chunk is not None:
        chunk = _force_chunk          # test hook; must be mult. of 128 or HW
    else:
        chunk = _select_chunk(HW, C, in_bytes, budget)
    n_chunks = pl.cdiv(HW, chunk)

    # v7x dual-TC: if the batch alone can't fill both cores (odd / singleton
    # B), split the HW chunks over an extra leading parallel axis and sum the
    # per-split accumulators in the epilogue.  No effect on v5e/v6e (1 TC).
    n_split = 2 if (n_chunks >= 2 and B % 2 == 1) else 1
    cps = pl.cdiv(n_chunks, n_split)              # chunks per split
    needs_mask = (n_split * cps * chunk) != HW    # any padded / dup lanes?

    # Free re-views: keep NCHW, pixels on the lane axis, no logits dtype change.
    x = logits.reshape(B, C, HW)
    t = target.reshape(B, 1, HW)
    if t.dtype != jnp.int32:
        t = t.astype(jnp.int32)

    def hw_block(s, h):
        hb = s * cps + h
        if n_split * cps > n_chunks:
            hb = jnp.minimum(hb, n_chunks - 1)    # clamp dup block of odd split
        return hb

    kernel = functools.partial(
        _dice_sums_kernel, num_classes=C, ignore_index=ignore_index,
        hw=HW, chunk=chunk, cps=cps, needs_mask=needs_mask)

    inter, union, count = pl.pallas_call(
        kernel,
        grid=(n_split, B, cps),
        in_specs=[
            pl.BlockSpec((1, C, chunk), lambda s, b, h: (b, 0, hw_block(s, h))),
            pl.BlockSpec((1, 1, chunk), lambda s, b, h: (b, 0, hw_block(s, h))),
        ],
        out_specs=(
            pl.BlockSpec((1, 1, C, 1), lambda s, b, h: (s, b, 0, 0)),
            pl.BlockSpec((1, 1, C, 1), lambda s, b, h: (s, b, 0, 0)),
            pl.BlockSpec((1, 1, 1, 1), lambda s, b, h: (s, b, 0, 0)),
        ),
        out_shape=(
            jax.ShapeDtypeStruct((n_split, B, C, 1), jnp.float32),
            jax.ShapeDtypeStruct((n_split, B, C, 1), jnp.float32),
            jax.ShapeDtypeStruct((n_split, B, 1, 1), jnp.float32),
        ),
        compiler_params=pltpu.CompilerParams(
            dimension_semantics=("parallel", "parallel", "arbitrary"),
            vmem_limit_bytes=vmem_limit),
    )(x, t)

    inter = jnp.sum(inter, axis=0).reshape(B, C)
    union = jnp.sum(union, axis=0).reshape(B, C)
    count = jnp.sum(count, axis=0).reshape(B)

    dice = (2.0 * inter + 1e-6) / (union + 1e-6)                 # (B, C)

    # valid_dice = dice_score[mask.any(1).any(1)]; loss = 1 - valid_dice.mean()
    validf = (count > 0.0).astype(jnp.float32)                   # (B,)
    # TODO(synk): an all-ignored batch yields 0/0 -> NaN here, matching
    # PyTorch's mean-of-empty behavior.
    mean_valid_dice = jnp.sum(dice * validf[:, None]) / (jnp.sum(validf) * C)
    return 1.0 - mean_valid_dice


def dice_loss_ref(logits, target, ignore_index):
    """Pure-JAX reference mirroring the PyTorch forward, for verification."""
    C = logits.shape[1]
    probs = jax.nn.sigmoid(logits) if C == 1 else jax.nn.softmax(logits, axis=1)
    mask = target != ignore_index
    t = jnp.where(mask, target, 0)
    if C == 1:
        t = t[:, None].astype(jnp.float32)
    else:
        t = jnp.transpose(jax.nn.one_hot(t, C, dtype=jnp.float32), (0, 3, 1, 2))
    t = t * mask[:, None].astype(jnp.float32)
    inter = jnp.sum(probs * t, axis=(2, 3))
    union = jnp.sum(probs + t, axis=(2, 3))
    dice = (2.0 * inter + 1e-6) / (union + 1e-6)
    valid = jnp.any(mask, axis=(1, 2)).astype(jnp.float32)
    return 1.0 - jnp.sum(dice * valid[:, None]) / (jnp.sum(valid) * C)


def _make_inputs(key, B, C, H, W, ignore_index):
    k1, k2, k3 = jax.random.split(key, 3)
    logits = jax.random.normal(k1, (B, C, H, W), dtype=jnp.float32)
    n_lbl = max(C, 2)  # for the C==1 sigmoid path use binary labels
    target = jax.random.randint(k2, (B, H, W), 0, n_lbl if C > 1 else 2,
                                dtype=jnp.int32)
    ignore_mask = jax.random.bernoulli(k3, 0.2, (B, H, W))
    target = jnp.where(ignore_mask, ignore_index, target).astype(jnp.int32)
    return logits, target


def _check(name, logits, target, ignore_index, **kw):
    ref = jax.block_until_ready(dice_loss_ref(logits, target, ignore_index))
    out = jax.block_until_ready(dice_loss_pallas(logits, target, ignore_index, **kw))
    # approx reciprocal in the softmax denominator -> slightly looser tolerance
    assert jnp.allclose(out, ref, rtol=1e-3, atol=1e-3), (name, out, ref)


if __name__ == "__main__":
    IGNORE_INDEX = -1
    key = jax.random.PRNGKey(0)
    k0, k1, k2, k3 = jax.random.split(key, 4)

    # 1) Default path: budget-sized chunk covers the whole (small) image.
    logits, target = _make_inputs(k0, 2, 4, 16, 16, IGNORE_INDEX)
    _check("default", logits, target, IGNORE_INDEX)

    # 2) Multi-chunk accumulation path (chunk divides HW, no tail masking).
    _check("chunked", logits, target, IGNORE_INDEX, _force_chunk=128)

    # 3) Odd batch -> dual-core split axis (per-split accumulators summed).
    logits1, target1 = _make_inputs(k1, 1, 4, 16, 16, IGNORE_INDEX)
    _check("split", logits1, target1, IGNORE_INDEX, _force_chunk=128)

    # 4) Non-divisible HW -> masked tail chunk with padded/garbage lanes.
    logits2, target2 = _make_inputs(k2, 2, 4, 15, 15, IGNORE_INDEX)
    _check("tail", logits2, target2, IGNORE_INDEX, _force_chunk=128)

    # 5) Single-class sigmoid path.
    logits3, target3 = _make_inputs(k3, 2, 1, 16, 16, IGNORE_INDEX)
    _check("sigmoid", logits3, target3, IGNORE_INDEX)

    print("KERNEL_OK")
</pallas_src>

<mosaic_0001>
module attributes {stable_mosaic.version = 11 : i64} {
  func.func @_dice_sums_kernel(%arg0: i32, %arg1: i32, %arg2: i32, %arg3: memref<1x4x256xf32, #tpu.memory_space<vmem>>, %arg4: memref<1x1x256xi32, #tpu.memory_space<vmem>>, %arg5: memref<1x1x4x1xf32, #tpu.memory_space<vmem>>, %arg6: memref<1x1x4x1xf32, #tpu.memory_space<vmem>>, %arg7: memref<1x1x1x1xf32, #tpu.memory_space<vmem>>) attributes {dimension_semantics = [#tpu.dimension_semantics<parallel>, #tpu.dimension_semantics<parallel>, #tpu.dimension_semantics<arbitrary>], iteration_bounds = array<i64: 1, 2, 1>, scalar_prefetch = 0 : i64, scratch_operands = 0 : i64, tpu.core_type = #tpu.core_type<tc>, window_params = [{transform_indices = @transform_0, window_bounds = array<i64: 1, 4, 256>}, {transform_indices = @transform_1, window_bounds = array<i64: 1, 1, 256>}, {transform_indices = @transform_2, window_bounds = array<i64: 1, 1, 4, 1>}, {transform_indices = @transform_3, window_bounds = array<i64: 1, 1, 4, 1>}, {transform_indices = @transform_4, window_bounds = array<i64: 1, 1, 1, 1>}]} {
    %c0_i32 = arith.constant 0 : i32
    %0 = arith.cmpi eq, %arg2, %c0_i32 : i32
    %1 = arith.extui %0 : i1 to i32
    %c0_i32_0 = arith.constant 0 : i32
    %2 = arith.cmpi ne, %1, %c0_i32_0 : i32
    scf.if %2 {
      %cst_35 = arith.constant 0.000000e+00 : f32
      %50 = vector.broadcast %cst_35 : f32 to vector<1x1x4x1xf32>
      %c0_36 = arith.constant 0 : index
      %c0_37 = arith.constant 0 : index
      %c0_38 = arith.constant 0 : index
      %c0_39 = arith.constant 0 : index
      %51 = vector.load %arg5[%c0_36, %c0_37, %c0_38, %c0_39] : memref<1x1x4x1xf32, #tpu.memory_space<vmem>>, vector<1x1x4x1xf32>
      tpu.vector_store %arg5[%c0_36, %c0_37, %c0_38, %c0_39], %50 {strides = array<i32>} : memref<1x1x4x1xf32, #tpu.memory_space<vmem>>, vector<1x1x4x1xf32>,
      %cst_40 = arith.constant 0.000000e+00 : f32
      %52 = vector.broadcast %cst_40 : f32 to vector<1x1x4x1xf32>
      %c0_41 = arith.constant 0 : index
      %c0_42 = arith.constant 0 : index
      %c0_43 = arith.constant 0 : index
      %c0_44 = arith.constant 0 : index
      %53 = vector.load %arg6[%c0_41, %c0_42, %c0_43, %c0_44] : memref<1x1x4x1xf32, #tpu.memory_space<vmem>>, vector<1x1x4x1xf32>
      tpu.vector_store %arg6[%c0_41, %c0_42, %c0_43, %c0_44], %52 {strides = array<i32>} : memref<1x1x4x1xf32, #tpu.memory_space<vmem>>, vector<1x1x4x1xf32>,
      %cst_45 = arith.constant 0.000000e+00 : f32
      %54 = vector.broadcast %cst_45 : f32 to vector<1x1x1x1xf32>
      %c0_46 = arith.constant 0 : index
      %c0_47 = arith.constant 0 : index
      %c0_48 = arith.constant 0 : index
      %c0_49 = arith.constant 0 : index
      %55 = vector.load %arg7[%c0_46, %c0_47, %c0_48, %c0_49] : memref<1x1x1x1xf32, #tpu.memory_space<vmem>>, vector<1x1x1x1xf32>
      tpu.vector_store %arg7[%c0_46, %c0_47, %c0_48, %c0_49], %54 {strides = array<i32>} : memref<1x1x1x1xf32, #tpu.memory_space<vmem>>, vector<1x1x1x1xf32>,
    } else {
    }
    %c0 = arith.constant 0 : index
    %c0_1 = arith.constant 0 : index
    %c0_2 = arith.constant 0 : index
    %3 = vector.load %arg3[%c0, %c0_1, %c0_2] : memref<1x4x256xf32, #tpu.memory_space<vmem>>, vector<1x4x256xf32>
    %4 = vector.shape_cast %3 : vector<1x4x256xf32> to vector<4x256xf32>
    %c0_3 = arith.constant 0 : index
    %c0_4 = arith.constant 0 : index
    %c0_5 = arith.constant 0 : index
    %5 = vector.load %arg4[%c0_3, %c0_4, %c0_5] : memref<1x1x256xi32, #tpu.memory_space<vmem>>, vector<1x1x256xi32>
    %6 = vector.shape_cast %5 : vector<1x1x256xi32> to vector<1x256xi32>
    %c-1_i32 = arith.constant -1 : i32
    %7 = vector.broadcast %c-1_i32 : i32 to vector<1x256xi32>
    %8 = arith.cmpi ne, %6, %7 : vector<1x256xi32>
    %cst = arith.constant dense<0xFF800000> : vector<256xf32>
    %9 = vector.multi_reduction <maximumf>, %4, %cst [0] : vector<4x256xf32> to vector<256xf32>
    %10 = vector.shape_cast %9 : vector<256xf32> to vector<1x256xf32>
    %11 = vector.broadcast %10 : vector<1x256xf32> to vector<4x256xf32>
    %12 = arith.subf %4, %11 : vector<4x256xf32>
    %13 = math.exp %12 : vector<4x256xf32>
    %cst_6 = arith.constant dense<0.000000e+00> : vector<256xf32>
    %14 = vector.multi_reduction <add>, %13, %cst_6 [0] : vector<4x256xf32> to vector<256xf32>
    %15 = vector.shape_cast %14 : vector<256xf32> to vector<1x256xf32>
    %16 = tpu.reciprocal %15 {approx = true} : vector<1x256xf32> -> vector<1x256xf32>
    %17 = vector.broadcast %16 : vector<1x256xf32> to vector<4x256xf32>
    %18 = arith.mulf %13, %17 : vector<4x256xf32>
    %19 = tpu.iota {dimensions = array<i32: 0>} : vector<4x256xi32>
    %20 = vector.broadcast %6 : vector<1x256xi32> to vector<4x256xi32>
    %21 = arith.cmpi eq, %19, %20 : vector<4x256xi32>
    %22 = vector.broadcast %8 : vector<1x256xi1> to vector<4x256xi1>
    %23 = arith.andi %21, %22 : vector<4x256xi1>
    %24 = arith.extui %23 : vector<4x256xi1> to vector<4x256xi32>
    %25 = arith.sitofp %24 : vector<4x256xi32> to vector<4x256xf32>
    %26 = arith.mulf %18, %25 : vector<4x256xf32>
    %cst_7 = arith.constant dense<0.000000e+00> : vector<4xf32>
    %27 = vector.multi_reduction <add>, %26, %cst_7 [1] : vector<4x256xf32> to vector<4xf32>
    %28 = vector.shape_cast %27 : vector<4xf32> to vector<4x1xf32>
    %cst_8 = arith.constant dense<0.000000e+00> : vector<4xf32>
    %29 = vector.multi_reduction <add>, %18, %cst_8 [1] : vector<4x256xf32> to vector<4xf32>
    %30 = vector.shape_cast %29 : vector<4xf32> to vector<4x1xf32>
    %cst_9 = arith.constant dense<0.000000e+00> : vector<4xf32>
    %31 = vector.multi_reduction <add>, %25, %cst_9 [1] : vector<4x256xf32> to vector<4xf32>
    %32 = vector.shape_cast %31 : vector<4xf32> to vector<4x1xf32>
    %33 = arith.addf %30, %32 : vector<4x1xf32>
    %c0_10 = arith.constant 0 : index
    %c0_11 = arith.constant 0 : index
    %c0_12 = arith.constant 0 : index
    %c0_13 = arith.constant 0 : index
    %34 = vector.load %arg5[%c0_10, %c0_11, %c0_12, %c0_13] : memref<1x1x4x1xf32, #tpu.memory_space<vmem>>, vector<1x1x4x1xf32>
    %35 = vector.shape_cast %28 : vector<4x1xf32> to vector<1x1x4x1xf32>
    %36 = arith.addf %34, %35 : vector<1x1x4x1xf32>
    %c0_14 = arith.constant 0 : index
    %c0_15 = arith.constant 0 : index
    %c0_16 = arith.constant 0 : index
    %c0_17 = arith.constant 0 : index
    %37 = vector.load %arg5[%c0_14, %c0_15, %c0_16, %c0_17] : memref<1x1x4x1xf32, #tpu.memory_space<vmem>>, vector<1x1x4x1xf32>
    tpu.vector_store %arg5[%c0_14, %c0_15, %c0_16, %c0_17], %36 {strides = array<i32>} : memref<1x1x4x1xf32, #tpu.memory_space<vmem>>, vector<1x1x4x1xf32>,
    %c0_18 = arith.constant 0 : index
    %c0_19 = arith.constant 0 : index
    %c0_20 = arith.constant 0 : index
    %c0_21 = arith.constant 0 : index
    %38 = vector.load %arg6[%c0_18, %c0_19, %c0_20, %c0_21] : memref<1x1x4x1xf32, #tpu.memory_space<vmem>>, vector<1x1x4x1xf32>
    %39 = vector.shape_cast %33 : vector<4x1xf32> to vector<1x1x4x1xf32>
    %40 = arith.addf %38, %39 : vector<1x1x4x1xf32>
    %c0_22 = arith.constant 0 : index
    %c0_23 = arith.constant 0 : index
    %c0_24 = arith.constant 0 : index
    %c0_25 = arith.constant 0 : index
    %41 = vector.load %arg6[%c0_22, %c0_23, %c0_24, %c0_25] : memref<1x1x4x1xf32, #tpu.memory_space<vmem>>, vector<1x1x4x1xf32>
    tpu.vector_store %arg6[%c0_22, %c0_23, %c0_24, %c0_25], %40 {strides = array<i32>} : memref<1x1x4x1xf32, #tpu.memory_space<vmem>>, vector<1x1x4x1xf32>,
    %c0_26 = arith.constant 0 : index
    %c0_27 = arith.constant 0 : index
    %c0_28 = arith.constant 0 : index
    %c0_29 = arith.constant 0 : index
    %42 = vector.load %arg7[%c0_26, %c0_27, %c0_28, %c0_29] : memref<1x1x1x1xf32, #tpu.memory_space<vmem>>, vector<1x1x1x1xf32>
    %43 = arith.extui %8 : vector<1x256xi1> to vector<1x256xi32>
    %44 = arith.sitofp %43 : vector<1x256xi32> to vector<1x256xf32>
    %cst_30 = arith.constant dense<0.000000e+00> : vector<1xf32>
    %45 = vector.multi_reduction <add>, %44, %cst_30 [1] : vector<1x256xf32> to vector<1xf32>
    %46 = vector.shape_cast %45 : vector<1xf32> to vector<1x1xf32>
    %47 = vector.shape_cast %46 : vector<1x1xf32> to vector<1x1x1x1xf32>
    %48 = arith.addf %42, %47 : vector<1x1x1x1xf32>
    %c0_31 = arith.constant 0 : index
    %c0_32 = arith.constant 0 : index
    %c0_33 = arith.constant 0 : index
    %c0_34 = arith.constant 0 : index
    %49 = vector.load %arg7[%c0_31, %c0_32, %c0_33, %c0_34] : memref<1x1x1x1xf32, #tpu.memory_space<vmem>>, vector<1x1x1x1xf32>
    tpu.vector_store %arg7[%c0_31, %c0_32, %c0_33, %c0_34], %48 {strides = array<i32>} : memref<1x1x1x1xf32, #tpu.memory_space<vmem>>, vector<1x1x1x1xf32>,
    return
  }
  func.func @transform_0(%arg0: i32, %arg1: i32, %arg2: i32) -> (i32, i32, i32) {
    %c1_i32 = arith.constant 1 : i32
    %0 = arith.muli %arg0, %c1_i32 : i32
    %1 = arith.addi %0, %arg2 : i32
    %c0_i32 = arith.constant 0 : i32
    %c0_i32_0 = arith.constant 0 : i32
    return %arg1, %c0_i32, %1 : i32, i32, i32
  }
  func.func @transform_1(%arg0: i32, %arg1: i32, %arg2: i32) -> (i32, i32, i32) {
    %c1_i32 = arith.constant 1 : i32
    %0 = arith.muli %arg0, %c1_i32 : i32
    %1 = arith.addi %0, %arg2 : i32
    %c0_i32 = arith.constant 0 : i32
    %c0_i32_0 = arith.constant 0 : i32
    return %arg1, %c0_i32, %1 : i32, i32, i32
  }
  func.func @transform_2(%arg0: i32, %arg1: i32, %arg2: i32) -> (i32, i32, i32, i32) {
    %c0_i32 = arith.constant 0 : i32
    %c0_i32_0 = arith.constant 0 : i32
    %c0_i32_1 = arith.constant 0 : i32
    return %arg0, %arg1, %c0_i32, %c0_i32_0 : i32, i32, i32, i32
  }
  func.func @transform_3(%arg0: i32, %arg1: i32, %arg2: i32) -> (i32, i32, i32, i32) {
    %c0_i32 = arith.constant 0 : i32
    %c0_i32_0 = arith.constant 0 : i32
    %c0_i32_1 = arith.constant 0 : i32
    return %arg0, %arg1, %c0_i32, %c0_i32_0 : i32, i32, i32, i32
  }
  func.func @transform_4(%arg0: i32, %arg1: i32, %arg2: i32) -> (i32, i32, i32, i32) {
    %c0_i32 = arith.constant 0 : i32
    %c0_i32_0 = arith.constant 0 : i32
    %c0_i32_1 = arith.constant 0 : i32
    return %arg0, %arg1, %c0_i32, %c0_i32_0 : i32, i32, i32, i32
  }
}

</mosaic_0001>

<llo_original>
// kernel: tpu_custom_call.1
$region0: #{tpu_custom_call.1}
  #allocation0 [shape = 'u32[]', space=smem, size = 0x4, offset = 0x4, fixed_abs, tag = 'smem constant byte address 0x4 - core index']
  #allocation1 [shape = 'u32[144,128]{1,0:T(1,128)}', space=vmem, size = 0x12000, scoped, tag = 'internal scratch']
  %s0 = inlined_call_operand.hbm [shape: f32[2,4,256], index: 0, kind: input, shape index: {}]
  %s1 = inlined_call_operand.hbm [shape: s32[2,1,256], index: 1, kind: input, shape index: {}]
  %s2 = inlined_call_operand.hbm [shape: f32[1,2,4,1], index: 2, kind: output, shape index: {0}]
  %s3 = inlined_call_operand.hbm [shape: f32[1,2,4,1], index: 3, kind: output, shape index: {1}]
  %s4 = inlined_call_operand.hbm [shape: f32[1,2,1,1], index: 4, kind: output, shape index: {2}]
  %5 = xla_tuple %s2, %s3, %s4
  %s6 = sld [smem:[#allocation0]]
  $region69: #{tpu_custom_call.1} parent=0
    _
  %s8 = ssub.s32 1, %s6
  %s9 = scalar_select 0, %s8, %s6
  $region1: #{tpu_custom_call.1} parent=0
    #allocation2 [shape = 'u8[8192]{0}', space=vmem, size = 0x2000, scoped, tag = 'input window, operand 0']
    #allocation3 [shape = 's32[2]{0}', space=sflag, size = 0x8, scoped, tag = 'scoped memory for tpu_custom_call.1']
    #allocation4 [shape = 's32[2]{0}', space=sflag, size = 0x8, scoped, tag = 'scoped memory for tpu_custom_call.1']
    #allocation5 [shape = 'u8[2048]{0}', space=vmem, size = 0x800, scoped, tag = 'input window, operand 1']
    #allocation6 [shape = 's32[2]{0}', space=sflag, size = 0x8, scoped, tag = 'scoped memory for tpu_custom_call.1']
    #allocation7 [shape = 'u8[4096]{0}', space=vmem, size = 0x1000, scoped, tag = 'output window, operand 0']
    #allocation8 [shape = 'u8[4096]{0}', space=vmem, size = 0x1000, scoped, tag = 'output window, operand 1']
    #allocation9 [shape = 's32[2]{0}', space=sflag, size = 0x8, scoped, tag = 'scoped memory for tpu_custom_call.1']
    #allocation10 [shape = 'u8[1024]{0}', space=vmem, size = 0x400, scoped, tag = 'output window, operand 2']
    %10 = vsyncpa [#allocation3], 0
    %s11 = scalar_lea.sflag [#allocation3], 1
    %12 = vsyncpa %s11, 0
    %13 = vsyncpa [#allocation6], 0
    %s14 = scalar_lea.sflag [#allocation6], 1
    %15 = vsyncpa %s14, 0
    %16 = vsyncpa [#allocation4], 0
    %s17 = scalar_lea.sflag [#allocation4], 1
    %18 = vsyncpa %s17, 0
    %19 = vsyncpa [#allocation9], 0
    %s20 = scalar_lea.sflag [#allocation9], 1
    %21 = vsyncpa %s20, 0
    loop: start=0, step=1, limit=4
    $region2: #{tpu_custom_call.1} parent=1 // loop_pre_header
      _
    $region3: #{tpu_custom_call.1} parent=1 // loop_header
      %s23 = sphi 0, %s27
      %p24 = scmp.ge.s32.totalorder %s23, 4
      %s30 = sphi 0, %s49
      %s31 = sphi 0, %s45
      %s32 = sphi 0, %s41
      %s33 = sphi 0, %s30
      %s34 = sphi 0, %s31
      %s35 = sphi 0, %s32
      %s36 = sphi 0, %s33
      %s37 = sphi 0, %s34
      %s38 = sphi 0, %s35
      %s56 = sphi 0, %s58
      %s59 = sphi 0, %s56
      %s60 = sphi 0, %s59
      %s76 = sphi 0, %s60
      %s86 = sphi 0, %s88
      %s89 = sphi 0, %s86
      %s90 = sphi 0, %s89
      %s106 = sphi 0, %s90
      %s114 = sphi 0, %s116
      %s117 = sphi 0, %s114
      %s118 = sphi 0, %s117
      %s134 = sphi 0, %s118
      %s142 = sphi 0, %s144
      %s145 = sphi 0, %s142
      %s146 = sphi 0, %s145
      %s162 = sphi 0, %s146
      %s170 = sphi 0, %s172
      %s173 = sphi 0, %s170
      %s174 = sphi 0, %s173
      %s190 = sphi 0, %s174
    $region4: #{tpu_custom_call.1} parent=1 // loop_header_branch
      %26 = sbr.rel (%p24) target = $region8
    $region5: #{tpu_custom_call.1} parent=1 // loop_body
      %s28 = ssub.s32 %s23, 1
      %s29 = ssub.s32 %s23, 2
      %s39 = sadd.s32 1, %s32
      %p40 = scmp.ge.s32.totalorder %s39, 1
      %s41 = scalar_select %p40, 0, %s39
      %s42 = sadd.s32 1, %s31
      %s43 = scalar_select %p40, %s42, %s31
      %p44 = scmp.ge.s32.totalorder %s43, 2
      %s45 = scalar_select %p44, 0, %s43
      %s46 = sadd.s32 1, %s30
      %s47 = scalar_select %p44, %s46, %s30
      %p48 = scmp.ge.s32.totalorder %s47, 1
      %s49 = scalar_select %p48, 0, %s47
      %s50 = sadd.s32 %s30, %s32
      %s51 = sadd.s32 %s49, %s41
      %s52 = ssub.s32 %s31, %s45
      %s53 = ssub.s32 %s50, %s51
      %s54 = sor.u32 %s52, %s53
      %p55 = scmp.eq.s32.totalorder %s54, 0
      %s57 = sadd.s32 %s56, 1
      %s58 = scalar_select %p55, %s56, %s57
      %p61 = pneg %p55
      %p62 = scmp.eq.s32.totalorder %s23, 1
      %p63 = por %p61, %p62
      %p64 = scmp.ne.s32.totalorder %s56, %s59
      %p65 = scmp.eq.s32.totalorder %s23, 0
      %p66 = por %p64, %p65
      %p67 = scmp.ne.s32.totalorder %s56, %s59
      %p68 = scmp.eq.s32.totalorder %s28, 1
      %p69 = por %p67, %p68
      %p70 = scmp.ne.s32.totalorder %s59, %s60
      %p71 = scmp.eq.s32.totalorder %s28, 0
      %p72 = por %p70, %p71
      %p73 = scmp.ne.s32.totalorder %s59, %s60
      %p74 = scmp.eq.s32.totalorder %s29, 1
      %p75 = por %p73, %p74
      %p77 = scmp.ne.s32.totalorder %s60, %s76
      %p78 = scmp.eq.s32.totalorder %s29, 0
      %p79 = por %p77, %p78
      %s80 = sadd.s32 %s30, %s32
      %s81 = sadd.s32 %s49, %s41
      %s82 = ssub.s32 %s31, %s45
      %s83 = ssub.s32 %s80, %s81
      %s84 = sor.u32 %s82, %s83
      %p85 = scmp.eq.s32.totalorder %s84, 0
      %s87 = sadd.s32 %s86, 1
      %s88 = scalar_select %p85, %s86, %s87
      %p91 = pneg %p85
      %p92 = scmp.eq.s32.totalorder %s23, 1
      %p93 = por %p91, %p92
      %p94 = scmp.ne.s32.totalorder %s86, %s89
      %p95 = scmp.eq.s32.totalorder %s23, 0
      %p96 = por %p94, %p95
      %p97 = scmp.ne.s32.totalorder %s86, %s89
      %p98 = scmp.eq.s32.totalorder %s28, 1
      %p99 = por %p97, %p98
      %p100 = scmp.ne.s32.totalorder %s89, %s90
      %p101 = scmp.eq.s32.totalorder %s28, 0
      %p102 = por %p100, %p101
      %p103 = scmp.ne.s32.totalorder %s89, %s90
      %p104 = scmp.eq.s32.totalorder %s29, 1
      %p105 = por %p103, %p104
      %p107 = scmp.ne.s32.totalorder %s90, %s106
      %p108 = scmp.eq.s32.totalorder %s29, 0
      %p109 = por %p107, %p108
      %s110 = ssub.s32 %s30, %s49
      %s111 = ssub.s32 %s31, %s45
      %s112 = sor.u32 %s110, %s111
      %p113 = scmp.eq.s32.totalorder %s112, 0
      %s115 = sadd.s32 %s114, 1
      %s116 = scalar_select %p113, %s114, %s115
      %p119 = pneg %p113
      %p120 = scmp.eq.s32.totalorder %s23, 1
      %p121 = por %p119, %p120
      %p122 = scmp.ne.s32.totalorder %s114, %s117
      %p123 = scmp.eq.s32.totalorder %s23, 0
      %p124 = por %p122, %p123
      %p125 = scmp.ne.s32.totalorder %s114, %s117
      %p126 = scmp.eq.s32.totalorder %s28, 1
      %p127 = por %p125, %p126
      %p128 = scmp.ne.s32.totalorder %s117, %s118
      %p129 = scmp.eq.s32.totalorder %s28, 0
      %p130 = por %p128, %p129
      %p131 = scmp.ne.s32.totalorder %s117, %s118
      %p132 = scmp.eq.s32.totalorder %s29, 1
      %p133 = por %p131, %p132
      %p135 = scmp.ne.s32.totalorder %s118, %s134
      %p136 = scmp.eq.s32.totalorder %s29, 0
      %p137 = por %p135, %p136
      %s138 = ssub.s32 %s30, %s49
      %s139 = ssub.s32 %s31, %s45
      %s140 = sor.u32 %s138, %s139
      %p141 = scmp.eq.s32.totalorder %s140, 0
      %s143 = sadd.s32 %s142, 1
      %s144 = scalar_select %p141, %s142, %s143
      %p147 = pneg %p141
      %p148 = scmp.eq.s32.totalorder %s23, 1
      %p149 = por %p147, %p148
      %p150 = scmp.ne.s32.totalorder %s142, %s145
      %p151 = scmp.eq.s32.totalorder %s23, 0
      %p152 = por %p150, %p151
      %p153 = scmp.ne.s32.totalorder %s142, %s145
      %p154 = scmp.eq.s32.totalorder %s28, 1
      %p155 = por %p153, %p154
      %p156 = scmp.ne.s32.totalorder %s145, %s146
      %p157 = scmp.eq.s32.totalorder %s28, 0
      %p158 = por %p156, %p157
      %p159 = scmp.ne.s32.totalorder %s145, %s146
      %p160 = scmp.eq.s32.totalorder %s29, 1
      %p161 = por %p159, %p160
      %p163 = scmp.ne.s32.totalorder %s146, %s162
      %p164 = scmp.eq.s32.totalorder %s29, 0
      %p165 = por %p163, %p164
      %s166 = ssub.s32 %s30, %s49
      %s167 = ssub.s32 %s31, %s45
      %s168 = sor.u32 %s166, %s167
      %p169 = scmp.eq.s32.totalorder %s168, 0
      %s171 = sadd.s32 %s170, 1
      %s172 = scalar_select %p169, %s170, %s171
      %p175 = pneg %p169
      %p176 = scmp.eq.s32.totalorder %s23, 1
      %p177 = por %p175, %p176
      %p178 = scmp.ne.s32.totalorder %s170, %s173
      %p179 = scmp.eq.s32.totalorder %s23, 0
      %p180 = por %p178, %p179
      %p181 = scmp.ne.s32.totalorder %s170, %s173
      %p182 = scmp.eq.s32.totalorder %s28, 1
      %p183 = por %p181, %p182
      %p184 = scmp.ne.s32.totalorder %s173, %s174
      %p185 = scmp.eq.s32.totalorder %s28, 0
      %p186 = por %p184, %p185
      %p187 = scmp.ne.s32.totalorder %s173, %s174
      %p188 = scmp.eq.s32.totalorder %s29, 1
      %p189 = por %p187, %p188
      %p191 = scmp.ne.s32.totalorder %s174, %s190
      %p192 = scmp.eq.s32.totalorder %s29, 0
      %p193 = por %p191, %p192
      %p194 = scmp.le.s32.totalorder 1, %s23
      %p195 = scmp.lt.s32.totalorder %s23, 3
      %p196 = pnand %p194, %p195
      %p197 = pneg %p196
      // Predicated region
      $region9: #{tpu_custom_call.1} parent=5 // pred_check
        _
      $region10: #{tpu_custom_call.1} parent=5 // pred_check_branch
        %199 = sbr.rel (%p196) target = $region12
      $region11: #{tpu_custom_call.1} parent=5 // pred_region
        %s200 = ssub.s32 %s23, 1
      $region12: #{tpu_custom_call.1} parent=5 // pred_fallthru
        _
      %p201 = scmp.lt.s32.totalorder %s23, 2
      // Predicated region
      $region13: #{tpu_custom_call.1} parent=5 // pred_check
        %p202 = pneg %p201
      $region14: #{tpu_custom_call.1} parent=5 // pred_check_branch
        %204 = sbr.rel (%p202) target = $region16
      $region15: #{tpu_custom_call.1} parent=5 // pred_region
        // Predicated region
        $region17: #{tpu_custom_call.1} parent=15 // pred_check
          %p205 = pneg %p66
        $region18: #{tpu_custom_call.1} parent=15 // pred_check_branch
          %207 = sbr.rel (%p205) target = $region20
        $region19: #{tpu_custom_call.1} parent=15 // pred_region
          %s208 = sand.u32 %s56, 1
          %s209 = scalar_lea.sflag [#allocation3], %s208
          %s210 = sand.u32 %s56, 1
          %s211 = smul.addr %s210, 8
          %s212 = scalar_lea.vmem [#allocation2], %s211
          %s213 = sadd.s32 %s30, %s32
          %s214 = smul.u32 2, %s213
          %s216 = ssub.s32 128, 128
          %217 = vsyncadd %s209, %s216
          %s218 = smul.addr %s31, 2
          %s219 = sadd.s32 %s214, %s218
          %s220 = smul.addr %s219, 64
          %s221 = scalar_lea.hbm %s0, %s220
          %s223 = sshll.u32 %s212, 4
          %s224 = int_to_ptr.vmem [resolvable:$true] %s223
          %226 = dma.hbm_to_vmem [thread:$0]  %s221, 128, %s224, %s209
        $region20: #{tpu_custom_call.1} parent=15 // pred_fallthru
          _
        // Predicated region
        $region21: #{tpu_custom_call.1} parent=15 // pred_check
          %p227 = pneg %p96
        $region22: #{tpu_custom_call.1} parent=15 // pred_check_branch
          %229 = sbr.rel (%p227) target = $region24
        $region23: #{tpu_custom_call.1} parent=15 // pred_region
          %s230 = sand.u32 %s86, 1
          %s231 = scalar_lea.sflag [#allocation6], %s230
          %s232 = sand.u32 %s86, 1
          %s233 = smul.addr %s232, 2
          %s234 = scalar_lea.vmem [#allocation5], %s233
          %s235 = sadd.s32 %s30, %s32
          %s236 = smul.u32 2, %s235
          %s238 = ssub.s32 32, 32
          %239 = vsyncadd %s231, %s238
          %s240 = smul.addr %s31, 2
          %s241 = sadd.s32 %s236, %s240
          %s242 = smul.addr %s241, 16
          %s243 = scalar_lea.hbm %s1, %s242
          %s245 = sshll.u32 %s234, 4
          %s246 = int_to_ptr.vmem [resolvable:$true] %s245
          %248 = dma.hbm_to_vmem [thread:$0]  %s243, 32, %s246, %s231
        $region24: #{tpu_custom_call.1} parent=15 // pred_fallthru
          _
      $region16: #{tpu_custom_call.1} parent=5 // pred_fallthru
        _
      %p249 = scmp.le.s32.totalorder 1, %s23
      %p250 = scmp.lt.s32.totalorder %s23, 3
      %p251 = pnand %p249, %p250
      %p252 = pneg %p251
      // Predicated region
      $region25: #{tpu_custom_call.1} parent=5 // pred_check
        _
      $region26: #{tpu_custom_call.1} parent=5 // pred_check_branch
        %254 = sbr.rel (%p251) target = $region28
      $region27: #{tpu_custom_call.1} parent=5 // pred_region
        %s255 = ssub.s32 %s23, 1
        %s256 = sand.u32 %s59, 1
        %s257 = scalar_lea.sflag [#allocation3], %s256
        %s258 = sand.u32 %s59, 1
        %s259 = smul.addr %s258, 8
        %s260 = scalar_lea.vmem [#allocation2], %s259
        // Predicated region
        $region29: #{tpu_custom_call.1} parent=27 // pred_check
          %p261 = pneg %p72
        $region30: #{tpu_custom_call.1} parent=27 // pred_check_branch
          %263 = sbr.rel (%p261) target = $region32
        $region31: #{tpu_custom_call.1} parent=27 // pred_region
          %264 = dma.done %s257, 128
        $region32: #{tpu_custom_call.1} parent=27 // pred_fallthru
          _
        %s265 = sand.u32 %s89, 1
        %s266 = scalar_lea.sflag [#allocation6], %s265
        %s267 = sand.u32 %s89, 1
        %s268 = smul.addr %s267, 2
        %s269 = scalar_lea.vmem [#allocation5], %s268
        // Predicated region
        $region33: #{tpu_custom_call.1} parent=27 // pred_check
          %p270 = pneg %p102
        $region34: #{tpu_custom_call.1} parent=27 // pred_check_branch
          %272 = sbr.rel (%p270) target = $region36
        $region35: #{tpu_custom_call.1} parent=27 // pred_region
          %273 = dma.done %s266, 32
        $region36: #{tpu_custom_call.1} parent=27 // pred_fallthru
          _
        %s274 = sand.u32 %s59, 1
        %s275 = scalar_lea.sflag [#allocation3], %s274
        %s276 = sand.u32 %s59, 1
        %s277 = smul.addr %s276, 8
        %s278 = scalar_lea.vmem [#allocation2], %s277
        %p279 = pneg %p72
        %p280 = pneg %p69
        %s281 = sand.u32 %s89, 1
        %s282 = scalar_lea.sflag [#allocation6], %s281
        %s283 = sand.u32 %s89, 1
        %s284 = smul.addr %s283, 2
        %s285 = scalar_lea.vmem [#allocation5], %s284
        %p286 = pneg %p102
        %p287 = pneg %p99
        %p288 = pneg %p130
        %p289 = pneg %p127
        %s290 = sand.u32 %s117, 1
        %s291 = scalar_lea.sflag [#allocation4], %s290
        %s292 = sand.u32 %s117, 1
        %s293 = smul.addr %s292, 4
        %s294 = scalar_lea.vmem [#allocation7], %s293
        %p295 = pneg %p158
        %p296 = pneg %p155
        %s297 = sand.u32 %s28, 1
        %s298 = scalar_lea.sflag [#allocation9], %s297
        %s299 = sand.u32 %s145, 1
        %s300 = smul.addr %s299, 4
        %s301 = scalar_lea.vmem [#allocation8], %s300
        %p302 = pneg %p186
        %p303 = pneg %p183
        %s304 = sand.u32 %s28, 1
        %s305 = scalar_lea.sflag [#allocation9], %s304
        %s306 = sand.u32 %s173, 1
        %s307 = scalar_lea.vmem [#allocation10], %s306
        %s308 = sadd.s32 %s33, %s35
        %s309 = smul.u32 2, %s308
        %s310 = sadd.s32 %s33, %s35
        %s311 = smul.u32 2, %s310
        %p312 = scmp.eq.s32.totalorder %s35, 0
        // Predicated region
        $region37: #{tpu_custom_call.1} parent=27 // pred_check
          %p313 = pneg %p312
        $region38: #{tpu_custom_call.1} parent=27 // pred_check_branch
          %315 = sbr.rel (%p313) target = $region40
        $region39: #{tpu_custom_call.1} parent=27 // pred_region
          %vm316 = vcmask 3072
          %317 = vst.msk [vmem:[%s294] sm:$0xf] %vm316, 0.0
          %318 = vst.msk [vmem:[%s301] sm:$0xf] %vm316, 0.0
          %vm319 = vcmask 0
          %320 = vst.msk [vmem:[%s307] sm:$0x1] %vm319, 0.0
        $region40: #{tpu_custom_call.1} parent=27 // pred_fallthru
          _
        %v321 = vld [vmem:[%s260] sm:$0xff]
        %v322 = vld [vmem:[%s269] sm:$0x3]
        %vm323 = vcmp.ne.s32.totalorder %v322, 4294967295
        %v325 = vcombine.high %v321, %v321
        %vm327 = vcmask 1043456
        %v328 = vsel %vm327, %v321, -inf
        %v329 = vrot.slane %v328, 4
        %v330 = vmax.f32 %v328, %v329
        %v331 = vrot.slane %v330, 2
        %v332 = vmax.f32 %v330, %v331
        %v333 = vrot.slane %v332, 1
        %v334 = vmax.f32 %v332, %v333
        %v335 = vsel %vm327, %v325, -inf
        %v336 = vrot.slane %v335, 4
        %v337 = vmax.f32 %v335, %v336
        %v338 = vrot.slane %v337, 2
        %v339 = vmax.f32 %v337, %v338
        %v340 = vrot.slane %v339, 1
        %v341 = vmax.f32 %v339, %v340
        %v344 = vcombine.low %v334, %v341
        %v346 = vsub.f32 %v321, %v344
        %v347 = vmul.f32 %v346, 1.442695
        %v348 = vpow.pop %v347
        %v350 = vcombine.high %v348, %v348
        %v352 = vsel %vm327, %v348, 0.0
        %v353 = vrot.slane %v352, 4
        %v354 = vadd.f32 %v352, %v353
        %v355 = vrot.slane %v354, 2
        %v356 = vadd.f32 %v354, %v355
        %v357 = vrot.slane %v356, 1
        %v358 = vadd.f32 %v356, %v357
        %v359 = vsel %vm327, %v350, 0.0
        %v360 = vrot.slane %v359, 4
        %v361 = vadd.f32 %v359, %v360
        %v362 = vrot.slane %v361, 2
        %v363 = vadd.f32 %v361, %v362
        %v364 = vrot.slane %v363, 1
        %v365 = vadd.f32 %v363, %v364
        %v366 = vrcp.pop %v358
        %v367 = vrcp.pop %v365
        %v370 = vcombine.low %v366, %v367
        %v372 = vmul.f32 %v348, %v370
        %v373 = vlaneseq
        %v374 = vshrl.u32 %v373, 7
        %v375 = vlaneseq
        %v376 = vshrl.u32 %v375, 7
        %v377 = vsub.s32 0, %v376
        %v378 = vrot.slane %v322, %v377
        %v379 = vlaneseq
        %v380 = vshrl.u32 %v379, 7
        %v381 = vsub.s32 1, %v380
        %v382 = vrot.slane %v322, %v381
        %vm383 = vcmp.eq.s32.totalorder %v374, %v378
        %vm384 = vcmp.eq.s32.totalorder %v374, %v382
        %v385 = vsel %vm323, 1, 0
        %v386 = vlaneseq
        %v387 = vshrl.u32 %v386, 7
        %v388 = vsub.s32 0, %v387
        %v389 = vrot.slane %v385, %v388
        %v390 = vlaneseq
        %v391 = vshrl.u32 %v390, 7
        %v392 = vsub.s32 1, %v391
        %v393 = vrot.slane %v385, %v392
        %vm394 = vcmp.eq.s32.totalorder %v389, 1
        %vm395 = vcmp.eq.s32.totalorder %v393, 1
        %vm396 = vmand %vm383, %vm394
        %vm397 = vmand %vm384, %vm395
        %v398 = vsel %vm396, 1, 0
        %v399 = vsel %vm397, 1, 0
        %v400 = vcvt.s32.f32 %v398
        %v401 = vcvt.s32.f32 %v399
        %v404 = vcombine.low %v400, %v401
        %v406 = vmul.f32 %v372, %v404
        %v408 = vcombine.high %v406, %v406
        %v410 = vsel %vm327, %v406, 0.0
        %v411 = vsel %vm327, %v408, 0.0
        %v412 = vadd.f32 %v410, %v411
        %413 = vadd.xlane.f32.xlu0 %v412
        %v414 = vpop.xlane.xlu0 %413
        %v416 = vcombine.high %v372, %v372
        %v418 = vsel %vm327, %v372, 0.0
        %v419 = vsel %vm327, %v416, 0.0
        %v420 = vadd.f32 %v418, %v419
        %421 = vadd.xlane.f32.xlu0 %v420
        %v422 = vpop.xlane.xlu0 %421
        %v423 = vsel %vm327, %v400, 0.0
        %v424 = vsel %vm327, %v401, 0.0
        %v425 = vadd.f32 %v423, %v424
        %426 = vadd.xlane.f32.xlu0 %v425
        %v427 = vpop.xlane.xlu0 %426
        %v428 = vadd.f32 %v422, %v427
        %v429 = vld [vmem:[%s294] sm:$0xf]
        %v430 = vadd.f32 %v429, %v414
        %vm431 = vcmask 3072
        %432 = vst.msk [vmem:[%s294] sm:$0xf] %vm431, %v430
        %v433 = vld [vmem:[%s301] sm:$0xf]
        %v434 = vadd.f32 %v433, %v428
        %435 = vst.msk [vmem:[%s301] sm:$0xf] %vm431, %v434
        %v436 = vld [vmem:[%s307] sm:$0x1]
        %v437 = vcvt.s32.f32 %v385
        %v439 = vlaneseq
        %v440 = vshrl.u32 %v439, 7
        %v441 = vsub.s32 0, %v440
        %v442 = vrot.slane %v437, %v441
        %v443 = vlaneseq
        %v444 = vshrl.u32 %v443, 7
        %v445 = vsub.s32 1, %v444
        %v446 = vrot.slane %v437, %v445
        %vm449 = vcmask 1040384
        %v450 = vsel %vm449, %v442, 0.0
        %v451 = vsel %vm449, %v446, 0.0
        %v452 = vadd.f32 %v450, %v451
        %453 = vadd.xlane.f32.xlu0 %v452
        %v454 = vpop.xlane.xlu0 %453
        %v455 = vadd.f32 %v436, %v454
        %vm456 = vcmask 0
        %457 = vst.msk [vmem:[%s307] sm:$0x1] %vm456, %v455
        %s458 = sand.u32 %s117, 1
        %s459 = scalar_lea.sflag [#allocation4], %s458
        %s460 = sand.u32 %s117, 1
        %s461 = smul.addr %s460, 4
        %s462 = scalar_lea.vmem [#allocation7], %s461
        %s463 = sand.u32 %s28, 1
        %s464 = scalar_lea.sflag [#allocation9], %s463
        %s465 = sand.u32 %s145, 1
        %s466 = smul.addr %s465, 4
        %s467 = scalar_lea.vmem [#allocation8], %s466
        %s468 = sand.u32 %s28, 1
        %s469 = scalar_lea.sflag [#allocation9], %s468
        %s470 = sand.u32 %s173, 1
        %s471 = scalar_lea.vmem [#allocation10], %s470
        // Predicated region
        $region41: #{tpu_custom_call.1} parent=27 // pred_check
          %p472 = pneg %p127
        $region42: #{tpu_custom_call.1} parent=27 // pred_check_branch
          %474 = sbr.rel (%p472) target = $region44
        $region43: #{tpu_custom_call.1} parent=27 // pred_region
          %s476 = ssub.s32 64, 64
          %477 = vsyncadd %s459, %s476
          %s478 = smul.addr %s33, 2
          %s479 = sadd.s32 %s34, %s478
          %s480 = smul.addr %s479, 64
          %s481 = scalar_lea.hbm %s2, %s480
          %s483 = sshll.u32 %s462, 4
          %s484 = int_to_ptr.vmem [resolvable:$true] %s483
          %486 = dma.vmem_to_hbm [thread:$0]  %s484, 64, %s481, %s459
        $region44: #{tpu_custom_call.1} parent=27 // pred_fallthru
          _
        // Predicated region
        $region45: #{tpu_custom_call.1} parent=27 // pred_check
          %p487 = pneg %p155
        $region46: #{tpu_custom_call.1} parent=27 // pred_check_branch
          %489 = sbr.rel (%p487) target = $region48
        $region47: #{tpu_custom_call.1} parent=27 // pred_region
          %s491 = ssub.s32 64, 64
          %492 = vsyncadd %s464, %s491
          %s493 = smul.addr %s33, 2
          %s494 = sadd.s32 %s34, %s493
          %s495 = smul.addr %s494, 64
          %s496 = scalar_lea.hbm %s3, %s495
          %s498 = sshll.u32 %s467, 4
          %s499 = int_to_ptr.vmem [resolvable:$true] %s498
          %501 = dma.vmem_to_hbm [thread:$0]  %s499, 64, %s496, %s464
        $region48: #{tpu_custom_call.1} parent=27 // pred_fallthru
          _
        // Predicated region
        $region49: #{tpu_custom_call.1} parent=27 // pred_check
          %p502 = pneg %p183
        $region50: #{tpu_custom_call.1} parent=27 // pred_check_branch
          %504 = sbr.rel (%p502) target = $region52
        $region51: #{tpu_custom_call.1} parent=27 // pred_region
          %s506 = ssub.s32 16, 16
          %507 = vsyncadd %s469, %s506
          %s508 = smul.addr %s33, 2
          %s509 = sadd.s32 %s34, %s508
          %s510 = smul.addr %s509, 16
          %s511 = scalar_lea.hbm %s4, %s510
          %s513 = sshll.u32 %s471, 4
          %s514 = int_to_ptr.vmem [resolvable:$true] %s513
          %516 = dma.vmem_to_hbm [thread:$0]  %s514, 16, %s511, %s469
        $region52: #{tpu_custom_call.1} parent=27 // pred_fallthru
          _
      $region28: #{tpu_custom_call.1} parent=5 // pred_fallthru
        _
      %p517 = scmp.le.s32.totalorder 2, %s23
      // Predicated region
      $region53: #{tpu_custom_call.1} parent=5 // pred_check
        %p518 = pneg %p517
      $region54: #{tpu_custom_call.1} parent=5 // pred_check_branch
        %520 = sbr.rel (%p518) target = $region56
      $region55: #{tpu_custom_call.1} parent=5 // pred_region
        %s521 = ssub.s32 %s23, 2
        // Predicated region
        $region57: #{tpu_custom_call.1} parent=55 // pred_check
          %p522 = pneg %p133
        $region58: #{tpu_custom_call.1} parent=55 // pred_check_branch
          %524 = sbr.rel (%p522) target = $region60
        $region59: #{tpu_custom_call.1} parent=55 // pred_region
          %s525 = sand.u32 %s118, 1
          %s526 = scalar_lea.sflag [#allocation4], %s525
          %s527 = sand.u32 %s118, 1
          %s528 = smul.addr %s527, 4
          %s529 = scalar_lea.vmem [#allocation7], %s528
          %530 = dma.done %s526, 64
        $region60: #{tpu_custom_call.1} parent=55 // pred_fallthru
          _
        // Predicated region
        $region61: #{tpu_custom_call.1} parent=55 // pred_check
          %p531 = pneg %p161
        $region62: #{tpu_custom_call.1} parent=55 // pred_check_branch
          %533 = sbr.rel (%p531) target = $region64
        $region63: #{tpu_custom_call.1} parent=55 // pred_region
          %s534 = sand.u32 %s29, 1
          %s535 = scalar_lea.sflag [#allocation9], %s534
          %s536 = sand.u32 %s146, 1
          %s537 = smul.addr %s536, 4
          %s538 = scalar_lea.vmem [#allocation8], %s537
          %539 = dma.done %s535, 64
        $region64: #{tpu_custom_call.1} parent=55 // pred_fallthru
          _
        // Predicated region
        $region65: #{tpu_custom_call.1} parent=55 // pred_check
          %p540 = pneg %p189
        $region66: #{tpu_custom_call.1} parent=55 // pred_check_branch
          %542 = sbr.rel (%p540) target = $region68
        $region67: #{tpu_custom_call.1} parent=55 // pred_region
          %s543 = sand.u32 %s29, 1
          %s544 = scalar_lea.sflag [#allocation9], %s543
          %s545 = sand.u32 %s174, 1
          %s546 = scalar_lea.vmem [#allocation10], %s545
          %547 = dma.done %s544, 16
        $region68: #{tpu_custom_call.1} parent=55 // pred_fallthru
          _
      $region56: #{tpu_custom_call.1} parent=5 // pred_fallthru
        _
    $region6: #{tpu_custom_call.1} parent=1 // loop_footer
      %s27 = sadd.s32 1, %s23
    $region7: #{tpu_custom_call.1} parent=1 // loop_footer_branch
      %22 = sbr.rel target = $region3
    $region8: #{tpu_custom_call.1} parent=1 // loop_exit
      _
    %548 = vsyncpa [#allocation3], 1
    %s549 = scalar_lea.sflag [#allocation3], 1
    %550 = vsyncpa %s549, 1
    %551 = vsyncpa [#allocation6], 1
    %s552 = scalar_lea.sflag [#allocation6], 1
    %553 = vsyncpa %s552, 1
    %554 = vsyncpa [#allocation4], 1
    %s555 = scalar_lea.sflag [#allocation4], 1
    %556 = vsyncpa %s555, 1
    %557 = vsyncpa [#allocation9], 1
    %s558 = scalar_lea.sflag [#allocation9], 1
    %559 = vsyncpa %s558, 1

</llo_original>
